<compile_context>
chip_gen: v7x
topology: tpu7x:2x2x1
jax: 0.10.0
libtpu: 0.0.40
codegen_flags: <defaults>
</compile_context>

<pallas_src>
import functools

import jax
import jax.numpy as jnp
from jax.experimental import pallas as pl
from jax.experimental.pallas import tpu as pltpu


def _round_up(x, m):
    return ((x + m - 1) // m) * m


def _focal_math(x, t, a0, a1, *, gamma, approx_recip):
    """Elementwise focal loss on f32 tiles. a0 = 1-alpha, a1 = 2*alpha-1 (or None)."""
    # Numerically stable BCE-with-logits (matches F.binary_cross_entropy_with_logits):
    #   bce = max(x, 0) - x*t + log1p(exp(-|x|))
    e = jnp.exp(-jnp.abs(x))                                   # EUP exp (reused below)
    bce = jnp.maximum(x, 0.0) - x * t + jnp.log1p(e)

    # sigmoid(x) reusing e (avoids a second full exp):
    #   x>=0: 1/(1+e)   x<0: e/(1+e)
    inv = pl.reciprocal(1.0 + e, approx=approx_recip)
    p_sig = jnp.where(x >= 0.0, 1.0, e) * inv
    # pt == exp(-bce_unweighted) for hard {0,1} targets (the intended use of this loss).
    pt = t * p_sig + (1.0 - t) * (1.0 - p_sig)

    if a0 is not None:
        # at = (1-alpha) + t*(2*alpha-1) == where(t==1, alpha, 1-alpha) for hard targets.
        bce = bce * (a0 + t * a1)

    w = 1.0 - pt
    g = float(gamma)
    if g == 2.0:                       # integer-power specialisation: no exp/log pow
        fw = w * w
    elif g == 1.0:
        fw = w
    elif g == 0.0:
        fw = jnp.ones_like(w)
    elif g == int(g) and 0.0 < g <= 8.0:
        fw = w
        for _ in range(int(g) - 1):
            fw = fw * w
    else:
        fw = w ** g                    # general float gamma: falls back to pow
    return fw * bce


def _focal_sum_kernel(x_ref, t_ref, a0_ref, a1_ref, out_ref, *,
                      gamma, use_alpha, approx_recip, row_tile, n_rows):
    p = pl.program_id(0)
    j = pl.program_id(1)
    n_j = pl.num_programs(1)

    @pl.when(j == 0)
    def _():
        out_ref[...] = jnp.zeros_like(out_ref)      # (8, C) VMEM vector accumulator

    x = x_ref[...].astype(jnp.float32)
    t = t_ref[...].astype(jnp.float32)
    a0 = a0_ref[...] if use_alpha else None
    a1 = a1_ref[...] if use_alpha else None

    focal = _focal_math(x, t, a0, a1, gamma=gamma, approx_recip=approx_recip)

    if n_rows % row_tile != 0:
        # Mask tail rows of the (only possibly partial) last tile.
        block_row0 = (p * n_j + j) * row_tile
        row_ids = block_row0 + jax.lax.broadcasted_iota(jnp.int32, (row_tile, 1), 0)
        focal = jnp.where(row_ids < n_rows, focal, 0.0)

    # Layout-preserving reshape (splits the sublane dim) + pure-VPU adds into (8, C).
    out_ref[...] += focal.reshape(row_tile // 8, 8, -1).sum(axis=0)


def _focal_map_kernel(x_ref, t_ref, a0_ref, a1_ref, out_ref, *,
                      gamma, use_alpha, approx_recip):
    x = x_ref[...].astype(jnp.float32)
    t = t_ref[...].astype(jnp.float32)
    a0 = a0_ref[...] if use_alpha else None
    a1 = a1_ref[...] if use_alpha else None
    focal = _focal_math(x, t, a0, a1, gamma=gamma, approx_recip=approx_recip)
    out_ref[...] = focal.astype(out_ref.dtype)


def focal_loss(inputs, targets, alpha=None, gamma=2.0, reduction="mean",
               row_tile=1024, approx_reciprocal=False):
    """Focal loss over [..., C] logits/targets.

    reduction: 'mean' / 'sum' (scalar) or 'none' (per-element map).
    targets may be a narrower dtype (bf16 / int8 / bool); math is done in f32.
    approx_reciprocal=True uses the raw EUP vrcp (a few low-order bits of accuracy
    traded for one less refined EUP op per element; useful when EUP-bound on v7x).
    """
    orig_shape = inputs.shape
    C = orig_shape[-1]
    if inputs.ndim != 2:
        inputs = inputs.reshape(-1, C)
        targets = targets.reshape(-1, C)
    N = inputs.shape[0]

    use_alpha = alpha is not None
    if use_alpha:
        a = jnp.asarray(alpha, jnp.float32).reshape(1, C)
        a0 = 1.0 - a            # (1, C)
        a1 = 2.0 * a - 1.0      # (1, C)
    else:
        a0 = jnp.zeros((1, C), jnp.float32)
        a1 = jnp.zeros((1, C), jnp.float32)

    # Tile sizing: big enough to amortize the ~0.35us/step pipeline overhead,
    # small enough that double-buffered input blocks stay comfortably inside the
    # default scoped VMEM on every generation (v7x has only 64 MiB physical VMEM).
    bytes_per_row = C * (inputs.dtype.itemsize + targets.dtype.itemsize)
    vmem_budget = 8 * 1024 * 1024            # ~8 MiB for the double-buffered inputs
    max_rows = max(8, (vmem_budget // (2 * max(bytes_per_row, 1))) // 8 * 8)
    rt = int(min(int(row_tile), max_rows, _round_up(N, 8)))
    rt = max(8, (rt // 8) * 8)

    total_tiles = pl.cdiv(N, rt)

    if reduction in ("mean", "sum"):
        # Leading "parallel" axis of partial sums -> lets Mosaic use both TensorCores
        # on v7x; P=1 (no-op) on single-core chips or odd tile counts.
        P = 2 if (total_tiles >= 2 and total_tiles % 2 == 0) else 1
        tiles_per_part = total_tiles // P

        kernel = functools.partial(
            _focal_sum_kernel, gamma=float(gamma), use_alpha=use_alpha,
            approx_recip=approx_reciprocal, row_tile=rt, n_rows=N)

        partials = pl.pallas_call(
            kernel,
            out_shape=jax.ShapeDtypeStruct((P, 8, C), jnp.float32),
            grid_spec=pltpu.PrefetchScalarGridSpec(
                num_scalar_prefetch=0,
                grid=(P, tiles_per_part),
                in_specs=[
                    pl.BlockSpec((rt, C), lambda p, j: (p * tiles_per_part + j, 0)),
                    pl.BlockSpec((rt, C), lambda p, j: (p * tiles_per_part + j, 0)),
                    pl.BlockSpec((1, C), lambda p, j: (0, 0)),   # 1 - alpha
                    pl.BlockSpec((1, C), lambda p, j: (0, 0)),   # 2*alpha - 1
                ],
                # Output block is the resident (8, C) accumulator for partition p.
                out_specs=pl.BlockSpec((None, 8, C), lambda p, j: (p, 0, 0)),
            ),
            compiler_params=pltpu.CompilerParams(
                dimension_semantics=("parallel", "arbitrary")),
        )(inputs, targets, a0, a1)

        total = jnp.sum(partials)            # tiny (P, 8, C) final reduce in XLA
        if reduction == "mean":
            return total / jnp.float32(N * C)
        return total

    elif reduction == "none":
        kernel = functools.partial(
            _focal_map_kernel, gamma=float(gamma), use_alpha=use_alpha,
            approx_recip=approx_reciprocal)

        out = pl.pallas_call(
            kernel,
            out_shape=jax.ShapeDtypeStruct((N, C), inputs.dtype),
            grid_spec=pltpu.PrefetchScalarGridSpec(
                num_scalar_prefetch=0,
                grid=(total_tiles,),
                in_specs=[
                    pl.BlockSpec((rt, C), lambda i: (i, 0)),
                    pl.BlockSpec((rt, C), lambda i: (i, 0)),
                    pl.BlockSpec((1, C), lambda i: (0, 0)),
                    pl.BlockSpec((1, C), lambda i: (0, 0)),
                ],
                out_specs=pl.BlockSpec((rt, C), lambda i: (i, 0)),
            ),
            compiler_params=pltpu.CompilerParams(
                dimension_semantics=("parallel",)),
        )(inputs, targets, a0, a1)
        return out.reshape(orig_shape)

    else:
        raise ValueError(f"unknown reduction: {reduction!r}")


if __name__ == "__main__":
    key = jax.random.PRNGKey(0)
    k1, k2, k3 = jax.random.split(key, 3)

    N, C = 16, 128  # [batch, classes]
    logits = jax.random.normal(k1, (N, C), dtype=jnp.float32)
    targets_f32 = (jax.random.uniform(k2, (N, C)) > 0.5).astype(jnp.float32)
    # {0,1} targets are exact in bf16 -> half the HBM read bytes for targets.
    targets = targets_f32.astype(jnp.bfloat16)
    alpha = jax.random.uniform(k3, (C,), minval=0.1, maxval=0.9, dtype=jnp.float32)

    def ref_focal(x, t, a, gamma=2.0):
        bce = jnp.maximum(x, 0.0) - x * t + jnp.log1p(jnp.exp(-jnp.abs(x)))
        pt = jnp.exp(-bce)
        if a is not None:
            at = jnp.where(t == 1.0, a[None, :], 1.0 - a[None, :])
            bce = bce * at
        return ((1.0 - pt) ** gamma) * bce

    # 1) mean, with per-class alpha
    loss = focal_loss(logits, targets, alpha=alpha, gamma=2.0, reduction="mean")
    loss = jax.block_until_ready(loss)
    ref = jnp.mean(ref_focal(logits, targets_f32, alpha))
    assert jnp.allclose(loss, ref, rtol=1e-4, atol=1e-6), (loss, ref)

    # 2) sum, no alpha, N not divisible by the row tile (exercises tail-row masking)
    N2 = 44
    x2 = jax.random.normal(jax.random.PRNGKey(1), (N2, C), dtype=jnp.float32)
    t2 = (jax.random.uniform(jax.random.PRNGKey(2), (N2, C)) > 0.5).astype(jnp.float32)
    s = focal_loss(x2, t2, alpha=None, gamma=2.0, reduction="sum", row_tile=16)
    s = jax.block_until_ready(s)
    ref_s = jnp.sum(ref_focal(x2, t2, None))
    assert jnp.allclose(s, ref_s, rtol=1e-4, atol=1e-4), (s, ref_s)

    # 3) 'none' elementwise map, and 'mean' through the 2-partition (parallel) path
    N3 = 64
    x3 = jax.random.normal(jax.random.PRNGKey(3), (N3, C), dtype=jnp.float32)
    t3 = (jax.random.uniform(jax.random.PRNGKey(4), (N3, C)) > 0.5).astype(jnp.float32)
    m = focal_loss(x3, t3, alpha=alpha, gamma=2.0, reduction="none", row_tile=16)
    m = jax.block_until_ready(m)
    ref_m = ref_focal(x3, t3, alpha)
    assert jnp.allclose(m, ref_m, rtol=1e-4, atol=1e-6)

    mm = focal_loss(x3, t3, alpha=alpha, gamma=2.0, reduction="mean", row_tile=16)
    mm = jax.block_until_ready(mm)
    assert jnp.allclose(mm, jnp.mean(ref_m), rtol=1e-4, atol=1e-6), (mm, jnp.mean(ref_m))

    print("KERNEL_OK")
</pallas_src>

<mosaic_0001>
module attributes {stable_mosaic.version = 11 : i64} {
  func.func @_focal_sum_kernel(%arg0: i32, %arg1: i32, %arg2: memref<16x128xf32, #tpu.memory_space<vmem>>, %arg3: memref<16x128xbf16, #tpu.memory_space<vmem>>, %arg4: memref<1x128xf32, #tpu.memory_space<vmem>>, %arg5: memref<1x128xf32, #tpu.memory_space<vmem>>, %arg6: memref<1x8x128xf32, #tpu.memory_space<vmem>>) attributes {dimension_semantics = [#tpu.dimension_semantics<parallel>, #tpu.dimension_semantics<arbitrary>], iteration_bounds = array<i64: 1, 1>, scalar_prefetch = 0 : i64, scratch_operands = 0 : i64, tpu.core_type = #tpu.core_type<tc>, window_params = [{transform_indices = @transform_0, window_bounds = array<i64: 16, 128>}, {transform_indices = @transform_1, window_bounds = array<i64: 16, 128>}, {pipeline_mode = #tpu.pipeline_mode<synchronous>, transform_indices = @transform_2, window_bounds = array<i64: 1, 128>}, {pipeline_mode = #tpu.pipeline_mode<synchronous>, transform_indices = @transform_3, window_bounds = array<i64: 1, 128>}, {transform_indices = @transform_4, window_bounds = array<i64: 1, 8, 128>}]} {
    %c0_i32 = arith.constant 0 : i32
    %0 = arith.cmpi eq, %arg1, %c0_i32 : i32
    %1 = arith.extui %0 : i1 to i32
    %c0_i32_0 = arith.constant 0 : i32
    %2 = arith.cmpi ne, %1, %c0_i32_0 : i32
    scf.if %2 {
      %cst_22 = arith.constant 0.000000e+00 : f32
      %50 = vector.broadcast %cst_22 : f32 to vector<8x128xf32>
      %c0_23 = arith.constant 0 : index
      %c0_24 = arith.constant 0 : index
      %c0_25 = arith.constant 0 : index
      %51 = vector.load %arg6[%c0_23, %c0_24, %c0_25] : memref<1x8x128xf32, #tpu.memory_space<vmem>>, vector<1x8x128xf32>
      %52 = vector.shape_cast %51 : vector<1x8x128xf32> to vector<8x128xf32>
      %53 = vector.shape_cast %50 : vector<8x128xf32> to vector<1x8x128xf32>
      tpu.vector_store %arg6[%c0_23, %c0_24, %c0_25], %53 {strides = array<i32>} : memref<1x8x128xf32, #tpu.memory_space<vmem>>, vector<1x8x128xf32>,
    } else {
    }
    %c0 = arith.constant 0 : index
    %c0_1 = arith.constant 0 : index
    %3 = vector.load %arg2[%c0, %c0_1] : memref<16x128xf32, #tpu.memory_space<vmem>>, vector<16x128xf32>
    %c0_2 = arith.constant 0 : index
    %c0_3 = arith.constant 0 : index
    %4 = vector.load %arg3[%c0_2, %c0_3] : memref<16x128xbf16, #tpu.memory_space<vmem>>, vector<16x128xbf16>
    %5 = arith.extf %4 : vector<16x128xbf16> to vector<16x128xf32>
    %c0_4 = arith.constant 0 : index
    %c0_5 = arith.constant 0 : index
    %6 = vector.load %arg4[%c0_4, %c0_5] : memref<1x128xf32, #tpu.memory_space<vmem>>, vector<1x128xf32>
    %c0_6 = arith.constant 0 : index
    %c0_7 = arith.constant 0 : index
    %7 = vector.load %arg5[%c0_6, %c0_7] : memref<1x128xf32, #tpu.memory_space<vmem>>, vector<1x128xf32>
    %8 = math.absf %3 : vector<16x128xf32>
    %cst = arith.constant 0.000000e+00 : f32
    %9 = vector.broadcast %cst : f32 to vector<16x128xf32>
    %10 = arith.subf %9, %8 : vector<16x128xf32>
    %11 = math.exp %10 : vector<16x128xf32>
    %cst_8 = arith.constant 0.000000e+00 : f32
    %12 = vector.broadcast %cst_8 : f32 to vector<16x128xf32>
    %13 = arith.maximumf %3, %12 : vector<16x128xf32>
    %14 = arith.mulf %3, %5 : vector<16x128xf32>
    %15 = arith.subf %13, %14 : vector<16x128xf32>
    %16 = math.log1p %11 : vector<16x128xf32>
    %17 = arith.addf %15, %16 : vector<16x128xf32>
    %cst_9 = arith.constant 1.000000e+00 : f32
    %18 = vector.broadcast %cst_9 : f32 to vector<16x128xf32>
    %19 = arith.addf %18, %11 : vector<16x128xf32>
    %20 = tpu.reciprocal %19 : vector<16x128xf32> -> vector<16x128xf32>
    %cst_10 = arith.constant 0.000000e+00 : f32
    %21 = vector.broadcast %cst_10 : f32 to vector<16x128xf32>
    %22 = arith.cmpf oge, %3, %21 : vector<16x128xf32>
    %cst_11 = arith.constant 1.000000e+00 : f32
    %23 = vector.broadcast %cst_11 : f32 to vector<16x128xf32>
    %24 = arith.select %22, %23, %11 : vector<16x128xi1>, vector<16x128xf32>
    %25 = arith.mulf %24, %20 : vector<16x128xf32>
    %26 = arith.mulf %5, %25 : vector<16x128xf32>
    %cst_12 = arith.constant 1.000000e+00 : f32
    %27 = vector.broadcast %cst_12 : f32 to vector<16x128xf32>
    %28 = arith.subf %27, %5 : vector<16x128xf32>
    %cst_13 = arith.constant 1.000000e+00 : f32
    %29 = vector.broadcast %cst_13 : f32 to vector<16x128xf32>
    %30 = arith.subf %29, %25 : vector<16x128xf32>
    %31 = arith.mulf %28, %30 : vector<16x128xf32>
    %32 = arith.addf %26, %31 : vector<16x128xf32>
    %33 = vector.broadcast %7 : vector<1x128xf32> to vector<16x128xf32>
    %34 = arith.mulf %5, %33 : vector<16x128xf32>
    %35 = vector.broadcast %6 : vector<1x128xf32> to vector<16x128xf32>
    %36 = arith.addf %35, %34 : vector<16x128xf32>
    %37 = arith.mulf %17, %36 : vector<16x128xf32>
    %cst_14 = arith.constant 1.000000e+00 : f32
    %38 = vector.broadcast %cst_14 : f32 to vector<16x128xf32>
    %39 = arith.subf %38, %32 : vector<16x128xf32>
    %40 = arith.mulf %39, %39 : vector<16x128xf32>
    %41 = arith.mulf %40, %37 : vector<16x128xf32>
    %c0_15 = arith.constant 0 : index
    %c0_16 = arith.constant 0 : index
    %c0_17 = arith.constant 0 : index
    %42 = vector.load %arg6[%c0_15, %c0_16, %c0_17] : memref<1x8x128xf32, #tpu.memory_space<vmem>>, vector<1x8x128xf32>
    %43 = vector.shape_cast %42 : vector<1x8x128xf32> to vector<8x128xf32>
    %44 = vector.shape_cast %41 : vector<16x128xf32> to vector<2x8x128xf32>
    %cst_18 = arith.constant dense<0.000000e+00> : vector<8x128xf32>
    %45 = vector.multi_reduction <add>, %44, %cst_18 [0] : vector<2x8x128xf32> to vector<8x128xf32>
    %46 = arith.addf %43, %45 : vector<8x128xf32>
    %c0_19 = arith.constant 0 : index
    %c0_20 = arith.constant 0 : index
    %c0_21 = arith.constant 0 : index
    %47 = vector.load %arg6[%c0_19, %c0_20, %c0_21] : memref<1x8x128xf32, #tpu.memory_space<vmem>>, vector<1x8x128xf32>
    %48 = vector.shape_cast %47 : vector<1x8x128xf32> to vector<8x128xf32>
    %49 = vector.shape_cast %46 : vector<8x128xf32> to vector<1x8x128xf32>
    tpu.vector_store %arg6[%c0_19, %c0_20, %c0_21], %49 {strides = array<i32>} : memref<1x8x128xf32, #tpu.memory_space<vmem>>, vector<1x8x128xf32>,
    return
  }
  func.func @transform_0(%arg0: i32, %arg1: i32) -> (i32, i32) {
    %c1_i32 = arith.constant 1 : i32
    %0 = arith.muli %arg0, %c1_i32 : i32
    %1 = arith.addi %0, %arg1 : i32
    %c0_i32 = arith.constant 0 : i32
    %c0_i32_0 = arith.constant 0 : i32
    return %1, %c0_i32 : i32, i32
  }
  func.func @transform_1(%arg0: i32, %arg1: i32) -> (i32, i32) {
    %c1_i32 = arith.constant 1 : i32
    %0 = arith.muli %arg0, %c1_i32 : i32
    %1 = arith.addi %0, %arg1 : i32
    %c0_i32 = arith.constant 0 : i32
    %c0_i32_0 = arith.constant 0 : i32
    return %1, %c0_i32 : i32, i32
  }
  func.func @transform_2(%arg0: i32, %arg1: i32) -> (i32, i32) {
    %c0_i32 = arith.constant 0 : i32
    %c0_i32_0 = arith.constant 0 : i32
    %c0_i32_1 = arith.constant 0 : i32
    return %c0_i32, %c0_i32_0 : i32, i32
  }
  func.func @transform_3(%arg0: i32, %arg1: i32) -> (i32, i32) {
    %c0_i32 = arith.constant 0 : i32
    %c0_i32_0 = arith.constant 0 : i32
    %c0_i32_1 = arith.constant 0 : i32
    return %c0_i32, %c0_i32_0 : i32, i32
  }
  func.func @transform_4(%arg0: i32, %arg1: i32) -> (i32, i32, i32) {
    %c0_i32 = arith.constant 0 : i32
    %c0_i32_0 = arith.constant 0 : i32
    %c0_i32_1 = arith.constant 0 : i32
    return %arg0, %c0_i32, %c0_i32_0 : i32, i32, i32
  }
}

</mosaic_0001>

<llo_original>
// kernel: tpu_custom_call.1
$region0: #{tpu_custom_call.1}
  #allocation0 [shape = 'u32[]', space=smem, size = 0x4, offset = 0x4, fixed_abs, tag = 'smem constant byte address 0x4 - core index']
  #allocation1 [shape = 'u32[144,128]{1,0:T(1,128)}', space=vmem, size = 0x12000, scoped, tag = 'internal scratch']
  %s0 = inlined_call_operand.hbm [shape: f32[16,128], index: 0, kind: input, shape index: {}]
  %s1 = inlined_call_operand.hbm [shape: bf16[16,128], index: 1, kind: input, shape index: {}]
  %s2 = inlined_call_operand.vmem [shape: f32[1,128], index: 2, kind: input, shape index: {}]
  %s3 = inlined_call_operand.vmem [shape: f32[1,128], index: 3, kind: input, shape index: {}]
  %s4 = inlined_call_operand.hbm [shape: f32[1,8,128], index: 4, kind: output, shape index: {}]
  %s5 = sld [smem:[#allocation0]]
  $region38: #{tpu_custom_call.1} parent=0
    _
  %s7 = ssub.s32 1, %s5
  %s8 = scalar_select 0, %s7, %s5
  $region1: #{tpu_custom_call.1} parent=0
    #allocation2 [shape = 'u8[8192]{0}', space=vmem, size = 0x2000, scoped, tag = 'input window, operand 0, single buffered']
    #allocation3 [shape = 's32[1]{0}', space=sflag, size = 0x4, scoped, tag = 'scoped memory for tpu_custom_call.1']
    #allocation4 [shape = 's32[1]{0}', space=sflag, size = 0x4, scoped, tag = 'scoped memory for tpu_custom_call.1']
    #allocation5 [shape = 'u8[4096]{0}', space=vmem, size = 0x1000, scoped, tag = 'input window, operand 1, single buffered']
    #allocation6 [shape = 's32[1]{0}', space=sflag, size = 0x4, scoped, tag = 'scoped memory for tpu_custom_call.1']
    #allocation7 [shape = 'u8[4096]{0}', space=vmem, size = 0x1000, scoped, tag = 'output window, operand 0, single buffered']
    %9 = vsyncpa [#allocation3], 0
    %10 = vsyncpa [#allocation6], 0
    %11 = vsyncpa [#allocation4], 0
    // Predicated region
    $region2: #{tpu_custom_call.1} parent=1 // pred_check
      _
    $region3: #{tpu_custom_call.1} parent=1 // pred_check_branch
      %13 = sbr.rel (0) target = $region5
    $region4: #{tpu_custom_call.1} parent=1 // pred_region
      %s14 = sadd.s32 0, 0
      %s15 = smul.u32 2, %s14
      %s17 = ssub.s32 256, 256
      %18 = vsyncadd [#allocation3], %s17
      %s19 = smul.addr %s15, 128
      %s20 = scalar_lea.hbm %s0, %s19
      %s21 = sshll.u32 [#allocation2], 4
      %s22 = int_to_ptr.vmem [resolvable:$true] %s21
      %27 = dma.hbm_to_vmem [thread:$0]  %s20, 256, %s22, [#allocation3], 128, 128, 8
    $region5: #{tpu_custom_call.1} parent=1 // pred_fallthru
      _
    // Predicated region
    $region6: #{tpu_custom_call.1} parent=1 // pred_check
      _
    $region7: #{tpu_custom_call.1} parent=1 // pred_check_branch
      %29 = sbr.rel (0) target = $region9
    $region8: #{tpu_custom_call.1} parent=1 // pred_region
      %s30 = sadd.s32 0, 0
      %s31 = smul.u32 2, %s30
      %s33 = ssub.s32 128, 128
      %34 = vsyncadd [#allocation6], %s33
      %s35 = smul.addr %s31, 64
      %s36 = scalar_lea.hbm %s1, %s35
      %s37 = sshll.u32 [#allocation5], 4
      %s38 = int_to_ptr.vmem [resolvable:$true] %s37
      %43 = dma.hbm_to_vmem [thread:$0]  %s36, 128, %s38, [#allocation6], 64, 64, 4
    $region9: #{tpu_custom_call.1} parent=1 // pred_fallthru
      _
    // Predicated region
    $region10: #{tpu_custom_call.1} parent=1 // pred_check
      _
    $region11: #{tpu_custom_call.1} parent=1 // pred_check_branch
      %45 = sbr.rel (0) target = $region13
    $region12: #{tpu_custom_call.1} parent=1 // pred_region
      _
    $region13: #{tpu_custom_call.1} parent=1 // pred_fallthru
      _
    // Predicated region
    $region14: #{tpu_custom_call.1} parent=1 // pred_check
      _
    $region15: #{tpu_custom_call.1} parent=1 // pred_check_branch
      %47 = sbr.rel (0) target = $region17
    $region16: #{tpu_custom_call.1} parent=1 // pred_region
      _
    $region17: #{tpu_custom_call.1} parent=1 // pred_fallthru
      _
    // Predicated region
    $region18: #{tpu_custom_call.1} parent=1 // pred_check
      _
    $region19: #{tpu_custom_call.1} parent=1 // pred_check_branch
      %49 = sbr.rel (0) target = $region21
    $region20: #{tpu_custom_call.1} parent=1 // pred_region
      %50 = dma.done [#allocation3], 256
    $region21: #{tpu_custom_call.1} parent=1 // pred_fallthru
      _
    // Predicated region
    $region22: #{tpu_custom_call.1} parent=1 // pred_check
      _
    $region23: #{tpu_custom_call.1} parent=1 // pred_check_branch
      %52 = sbr.rel (0) target = $region25
    $region24: #{tpu_custom_call.1} parent=1 // pred_region
      %53 = dma.done [#allocation6], 128
    $region25: #{tpu_custom_call.1} parent=1 // pred_fallthru
      _
    %s54 = sadd.s32 0, 0
    %s55 = smul.u32 2, %s54
    %s56 = sadd.s32 0, 0
    %s57 = smul.u32 2, %s56
    %p58 = scmp.eq.s32.totalorder 0, 0
    // Predicated region
    $region26: #{tpu_custom_call.1} parent=1 // pred_check
      %p59 = pneg %p58
    $region27: #{tpu_custom_call.1} parent=1 // pred_check_branch
      %61 = sbr.rel (%p59) target = $region29
    $region28: #{tpu_custom_call.1} parent=1 // pred_region
      %62 = vst [vmem:[#allocation7] sm:$0xff] 0.0
    $region29: #{tpu_custom_call.1} parent=1 // pred_fallthru
      _
    %v63 = vld [vmem:[#allocation2] sm:$0xff]
    %v64 = vld [vmem:[#allocation2 + $0x8] sm:$0xff]
    %v65 = vld [vmem:[#allocation5] sm:$0xf]
    %v66 = vld [vmem:[#allocation5 + $0x4] sm:$0xf]
    %v67 = vunpack.c.l.bf16 %v65
    %v68 = vunpack.c.l.bf16 %v66
    %v69 = vld [vmem:[%s2] sm:$0x1]
    %v70 = vld [vmem:[%s3] sm:$0x1]
    %v71 = vand.u32 2147483647, %v63
    %v72 = vand.u32 2147483647, %v64
    %v73 = vsub.f32 0.0, %v71
    %v74 = vsub.f32 0.0, %v72
    %v75 = vmul.f32 %v73, 1.442695
    %v76 = vpow.pop %v75
    %v77 = vmul.f32 %v74, 1.442695
    %v78 = vpow.pop %v77
    %v79 = vmax.f32 %v63, 0.0
    %v80 = vmax.f32 %v64, 0.0
    %v81 = vmul.f32 %v63, %v67
    %v82 = vmul.f32 %v64, %v68
    %v83 = vsub.f32 %v79, %v81
    %v84 = vsub.f32 %v80, %v82
    %v85 = vadd.f32 %v76, 1.0
    %v86 = vlog2.pop %v85
    %v87 = vmul.f32 %v86, 0.6931472
    %v88 = vmul.f32 -0.5, %v76
    %v89 = vadd.f32 %v88, 1.0
    %v90 = vmul.f32 %v89, %v76
    %v91 = vand.u32 2147483647, %v76
    %vm92 = vcmp.lt.f32.partialorder %v91, 0.0004427343
    %v93 = vsel %vm92, %v90, %v87
    %v94 = vadd.f32 %v78, 1.0
    %v95 = vlog2.pop %v94
    %v96 = vmul.f32 %v95, 0.6931472
    %v97 = vmul.f32 -0.5, %v78
    %v98 = vadd.f32 %v97, 1.0
    %v99 = vmul.f32 %v98, %v78
    %v100 = vand.u32 2147483647, %v78
    %vm101 = vcmp.lt.f32.partialorder %v100, 0.0004427343
    %v102 = vsel %vm101, %v99, %v96
    %v103 = vadd.f32 %v83, %v93
    %v104 = vadd.f32 %v84, %v102
    %v105 = vadd.f32 %v76, 1.0
    %v106 = vadd.f32 %v78, 1.0
    %v107 = vrcp.pop %v105
    %v108 = vrcp.pop %v106
    %vm109 = vcmp.ge.f32.partialorder %v63, 0.0
    %vm110 = vcmp.ge.f32.partialorder %v64, 0.0
    %v111 = vsel %vm109, 1.0, %v76
    %v112 = vsel %vm110, 1.0, %v78
    %v113 = vmul.f32 %v111, %v107
    %v114 = vmul.f32 %v112, %v108
    %v115 = vmul.f32 %v67, %v113
    %v116 = vmul.f32 %v68, %v114
    %v117 = vsub.f32 1.0, %v67
    %v118 = vsub.f32 1.0, %v68
    %v119 = vsub.f32 1.0, %v113
    %v120 = vsub.f32 1.0, %v114
    %v121 = vmul.f32 %v117, %v119
    %v122 = vmul.f32 %v118, %v120
    %v123 = vadd.f32 %v115, %v121
    %v124 = vadd.f32 %v116, %v122
    %v126 = vlaneseq
    %v127 = vshrl.u32 %v126, 7
    %v128 = vsub.s32 0, %v127
    %v129 = vrot.slane %v70, %v128
    %v131 = vmul.f32 %v67, %v129
    %v132 = vmul.f32 %v68, %v129
    %v134 = vlaneseq
    %v135 = vshrl.u32 %v134, 7
    %v136 = vsub.s32 0, %v135
    %v137 = vrot.slane %v69, %v136
    %v139 = vadd.f32 %v137, %v131
    %v140 = vadd.f32 %v137, %v132
    %v141 = vmul.f32 %v103, %v139
    %v142 = vmul.f32 %v104, %v140
    %v143 = vsub.f32 1.0, %v123
    %v144 = vsub.f32 1.0, %v124
    %v145 = vmul.f32 %v143, %v143
    %v146 = vmul.f32 %v144, %v144
    %v147 = vmul.f32 %v145, %v141
    %v148 = vmul.f32 %v146, %v142
    %v149 = vld [vmem:[#allocation7] sm:$0xff]
    %v150 = vadd.f32 %v147, %v148
    %v151 = vadd.f32 %v149, %v150
    %152 = vst [vmem:[#allocation7] sm:$0xff] %v151
    // Predicated region
    $region30: #{tpu_custom_call.1} parent=1 // pred_check
      _
    $region31: #{tpu_custom_call.1} parent=1 // pred_check_branch
      %154 = sbr.rel (0) target = $region33
    $region32: #{tpu_custom_call.1} parent=1 // pred_region
      %s156 = ssub.s32 128, 128
      %157 = vsyncadd [#allocation4], %s156
      %s159 = sshll.u32 [#allocation7], 4
      %s160 = int_to_ptr.vmem [resolvable:$true] %s159
      %162 = dma.vmem_to_hbm [thread:$0]  %s160, 128, %s4, [#allocation4]
    $region33: #{tpu_custom_call.1} parent=1 // pred_fallthru
      _
    // Predicated region
    $region34: #{tpu_custom_call.1} parent=1 // pred_check
      _
    $region35: #{tpu_custom_call.1} parent=1 // pred_check_branch
      %164 = sbr.rel (0) target = $region37
    $region36: #{tpu_custom_call.1} parent=1 // pred_region
      %165 = dma.done [#allocation4], 128
    $region37: #{tpu_custom_call.1} parent=1 // pred_fallthru
      _
    %166 = vsyncpa [#allocation3], 1
    %167 = vsyncpa [#allocation6], 1
    %168 = vsyncpa [#allocation4], 1

</llo_original>
